<compile_context>
chip_gen: v6e
topology: v6e:2x2x1
jax: 0.10.0
libtpu: 0.0.40
codegen_flags: <defaults>
</compile_context>

<pallas_src>
import functools

import jax
import jax.numpy as jnp
import numpy as np
from jax.experimental import pallas as pl
from jax.experimental.pallas import tpu as pltpu


def _round_up(a: int, b: int) -> int:
    return (a + b - 1) // b * b


_ACTIVATIONS = {
    "relu": lambda h: jnp.maximum(h, 0.0),
    "sigmoid": jax.nn.sigmoid,
    "tanh": jnp.tanh,
    "leaky_relu": lambda h: jnp.where(h > 0, h, 0.01 * h),
}


# ----------------------------------------------------------------------------
# Pallas kernel.  One grid step = (node type t, row tile r).
#   out_sz_ref, n_rows_ref : SMEM scalar-prefetch arrays [T] (int32)
#   x_ref  : [1, row_tile, K_pad]   zero-padded inputs of type t
#   w1_ref : [1, K_pad, H_pad]      trunk Linear weight (zero-padded)
#   b1_ref : [1, 1, H_pad]          trunk bias
#   wh_ref : [1, H_pad, HEAD_PAD]   fused policy|value weight
#                                   (cols [0,out_sz)=policy, col HEAD_PAD-1=value)
#   bh_ref : [1, 1, HEAD_PAD]       fused policy|value bias
#   o_ref  : [1, row_tile, HEAD_PAD] cols [0,out_sz)=softmax probs (or dueling Q),
#                                    col HEAD_PAD-1 = state value, rest zero.
# ----------------------------------------------------------------------------
def _actor_critic_kernel(out_sz_ref, n_rows_ref,
                         x_ref, w1_ref, b1_ref, wh_ref, bh_ref,
                         o_ref, *, activation: str, dueling: bool):
    t = pl.program_id(0)

    x = x_ref[0]                                                    # [rt, K_pad]
    h = jnp.dot(x, w1_ref[0], preferred_element_type=jnp.float32) + b1_ref[0]
    h = _ACTIVATIONS[activation](h)

    # Fused policy + value head in one lane-dense matmul.
    y = jnp.dot(h.astype(wh_ref.dtype), wh_ref[0],
                preferred_element_type=jnp.float32) + bh_ref[0]     # [rt, HEAD_PAD]

    rt, hp = y.shape
    out_sz = out_sz_ref[t]
    col = jax.lax.broadcasted_iota(jnp.int32, (rt, hp), 1)
    pol_mask = col < out_sz
    val_mask = col == (hp - 1)
    val_col = jnp.where(val_mask, y, 0.0)                           # value in last lane

    if dueling:
        # Q = V + A - A.mean(); the reference `.mean()` has no dim, i.e. the
        # mean over the whole per-type advantage tensor.  The wrapper forces a
        # single row tile per type in dueling mode, so the reduction below
        # covers all valid rows of this type.
        value = jnp.sum(val_col, axis=-1, keepdims=True)            # [rt, 1]
        n_valid = n_rows_ref[t]
        row = jax.lax.broadcasted_iota(jnp.int32, (rt, hp), 0)
        valid = pol_mask & (row < n_valid)
        adv_sum = jnp.sum(jnp.where(valid, y, 0.0))
        denom = jnp.maximum((n_valid * out_sz).astype(jnp.float32), 1.0)
        q = value + y - adv_sum / denom
        o_ref[0] = jnp.where(pol_mask, q, 0.0) + val_col
    else:
        logits = jnp.where(pol_mask, y, -jnp.inf)
        m = jnp.max(logits, axis=-1, keepdims=True)
        e = jnp.exp(logits - m)                  # exactly 0 outside pol_mask
        s = jnp.sum(e, axis=-1, keepdims=True)
        prob = e * pl.reciprocal(s, approx=True)
        o_ref[0] = prob + val_col                # prob is 0 in the value lane


def _fused_forward(out_sizes, n_rows, x, w1, b1, wh, bh, *,
                   row_tile, activation, dueling):
    T, n_pad, k_pad = x.shape
    h_pad = w1.shape[2]
    head_pad = wh.shape[2]
    grid = (T, n_pad // row_tile)

    kernel = functools.partial(_actor_critic_kernel,
                               activation=activation, dueling=dueling)

    return pl.pallas_call(
        kernel,
        out_shape=jax.ShapeDtypeStruct((T, n_pad, head_pad), jnp.float32),
        grid_spec=pltpu.PrefetchScalarGridSpec(
            num_scalar_prefetch=2,
            grid=grid,
            in_specs=[
                pl.BlockSpec((1, row_tile, k_pad), lambda t, r, os, nr: (t, r, 0)),
                pl.BlockSpec((1, k_pad, h_pad),    lambda t, r, os, nr: (t, 0, 0)),
                pl.BlockSpec((1, 1, h_pad),        lambda t, r, os, nr: (t, 0, 0)),
                pl.BlockSpec((1, h_pad, head_pad), lambda t, r, os, nr: (t, 0, 0)),
                pl.BlockSpec((1, 1, head_pad),     lambda t, r, os, nr: (t, 0, 0)),
            ],
            out_specs=pl.BlockSpec((1, row_tile, head_pad),
                                   lambda t, r, os, nr: (t, r, 0)),
        ),
        compiler_params=pltpu.CompilerParams(
            dimension_semantics=("parallel", "parallel")),
    )(out_sizes, n_rows, x, w1, b1, wh, bh)


# ----------------------------------------------------------------------------
# Parameter construction + forward glue (pure JAX, fully jittable).
# ----------------------------------------------------------------------------
def _xavier_uniform(key, fan_in, fan_out, gain=1.0):
    limit = gain * (6.0 / (fan_in + fan_out)) ** 0.5
    return jax.random.uniform(key, (fan_in, fan_out), jnp.float32, -limit, limit)


def _bias_uniform(key, fan_in, size):
    # PyTorch nn.Linear default bias init: U(-1/sqrt(fan_in), 1/sqrt(fan_in))
    bound = 1.0 / (fan_in ** 0.5)
    return jax.random.uniform(key, (size,), jnp.float32, -bound, bound)


class ActorCriticLayerPallas:
    def __init__(self, num_node_types, input_size, hidden_size, output_sizes,
                 key, dueling_dqn=False, activation="relu",
                 use_bf16_matmul=False):
        assert len(output_sizes) == num_node_types
        assert activation in _ACTIVATIONS
        self.num_node_types = num_node_types
        self.input_size = input_size
        self.hidden_size = hidden_size
        self.output_sizes = list(output_sizes)
        self.dueling_dqn = dueling_dqn
        self.activation = activation
        self.use_bf16_matmul = use_bf16_matmul  # free bandwidth win on v6e/v7x

        self.k_pad = _round_up(input_size, 128)
        self.h_pad = _round_up(hidden_size, 128)
        self.head_pad = _round_up(max(output_sizes) + 1, 128)
        self.val_col = self.head_pad - 1

        T = num_node_types
        w1_s = jnp.zeros((T, self.k_pad, self.h_pad), jnp.float32)
        b1_s = jnp.zeros((T, 1, self.h_pad), jnp.float32)
        wh_s = jnp.zeros((T, self.h_pad, self.head_pad), jnp.float32)
        bh_s = jnp.zeros((T, 1, self.head_pad), jnp.float32)

        gain = 1.0  # nn.init.calculate_gain('sigmoid') == 1.0
        for nt in range(T):
            key, k1, k2, k3, k4, k5, k6 = jax.random.split(key, 7)
            out_sz = output_sizes[nt]
            w1 = _xavier_uniform(k1, input_size, hidden_size, gain)
            b1 = _bias_uniform(k2, input_size, hidden_size)
            wp = _xavier_uniform(k3, hidden_size, out_sz, gain)
            bp = _bias_uniform(k4, hidden_size, out_sz)
            wv = _xavier_uniform(k5, hidden_size, 1, gain)
            bv = _bias_uniform(k6, hidden_size, 1)
            w1_s = w1_s.at[nt, :input_size, :hidden_size].set(w1)
            b1_s = b1_s.at[nt, 0, :hidden_size].set(b1)
            wh_s = wh_s.at[nt, :hidden_size, :out_sz].set(wp)
            bh_s = bh_s.at[nt, 0, :out_sz].set(bp)
            wh_s = wh_s.at[nt, :hidden_size, self.val_col].set(wv[:, 0])
            bh_s = bh_s.at[nt, 0, self.val_col].set(bv[0])

        wdtype = jnp.bfloat16 if use_bf16_matmul else jnp.float32
        self.w1 = w1_s.astype(wdtype)
        self.wh = wh_s.astype(wdtype)
        self.b1 = b1_s
        self.bh = bh_s
        self.out_sizes_arr = jnp.asarray(output_sizes, jnp.int32)

    def __call__(self, x_dict, node_type):
        T = self.num_node_types
        n_rows = []
        for nt in range(T):
            x_nt = x_dict.get(nt)
            n_rows.append(0 if x_nt is None else int(x_nt.shape[0]))

        max_n = max(max(n_rows), 1)
        n_pad = max(8, _round_up(max_n, 8))
        if self.dueling_dqn or n_pad <= 512:
            row_tile = n_pad         # dueling needs the whole per-type tensor
        else:
            row_tile = 512           # v7x-safe tile (well under 64 MiB VMEM)
            n_pad = _round_up(n_pad, 512)

        xdtype = jnp.bfloat16 if self.use_bf16_matmul else jnp.float32
        x_stacked = jnp.zeros((T, n_pad, self.k_pad), xdtype)
        for nt in range(T):
            if n_rows[nt] > 0:
                x_stacked = x_stacked.at[nt, :n_rows[nt], :self.input_size].set(
                    x_dict[nt].astype(xdtype))

        out = _fused_forward(
            self.out_sizes_arr, jnp.asarray(n_rows, jnp.int32),
            x_stacked, self.w1, self.b1, self.wh, self.bh,
            row_tile=row_tile, activation=self.activation,
            dueling=self.dueling_dqn)

        max_out = max(self.output_sizes)
        pol_t = out[:, :, :max_out]            # [T, n_pad, max_out]
        val_t = out[:, :, self.val_col]        # [T, n_pad]

        # On-device scatter back to global node order: for global node g of
        # type t with within-type rank r, take pol_t[t, r] / val_t[t, r].
        node_type = node_type.astype(jnp.int32)
        ranks = jnp.zeros_like(node_type)
        for nt in range(T):
            is_nt = node_type == nt
            rank_nt = jnp.cumsum(is_nt.astype(jnp.int32)) - 1
            ranks = jnp.where(is_nt, rank_nt, ranks)

        policy_out = pol_t[node_type, ranks]   # [n_nodes, max_out]
        value_out = val_t[node_type, ranks]    # [n_nodes]
        return policy_out, value_out


if __name__ == "__main__":
    key = jax.random.PRNGKey(0)

    num_node_types = 2
    input_size = 16
    hidden_size = 32
    output_sizes = [6, 8]

    node_type = jnp.array([0, 1, 0, 1, 1, 0, 0, 1], dtype=jnp.int32)
    key, kp, kp2, kx0, kx1 = jax.random.split(key, 5)

    n0 = int((node_type == 0).sum())
    n1 = int((node_type == 1).sum())
    x = {
        0: jax.random.normal(kx0, (n0, input_size), jnp.float32),
        1: jax.random.normal(kx1, (n1, input_size), jnp.float32),
    }

    # ------------------------- softmax (actor) mode -------------------------
    layer = ActorCriticLayerPallas(num_node_types, input_size, hidden_size,
                                   output_sizes, kp, dueling_dqn=False)

    fwd = jax.jit(layer.__call__)           # fully jittable: no host sync
    policy, value = fwd(x, node_type)
    jax.block_until_ready((policy, value))

    assert policy.shape == (node_type.shape[0], max(output_sizes))
    assert value.shape == (node_type.shape[0],)

    # pure-numpy reference (mirrors the PyTorch forward)
    max_out = max(output_sizes)
    ref_pol = np.zeros((node_type.shape[0], max_out), np.float32)
    ref_val = np.zeros((node_type.shape[0],), np.float32)
    nt_np = np.asarray(node_type)
    for nt in range(num_node_types):
        idx = np.nonzero(nt_np == nt)[0]
        out_sz = output_sizes[nt]
        xs = np.asarray(x[nt], np.float32)
        w1 = np.asarray(layer.w1[nt, :input_size, :hidden_size], np.float32)
        b1 = np.asarray(layer.b1[nt, 0, :hidden_size], np.float32)
        wp = np.asarray(layer.wh[nt, :hidden_size, :out_sz], np.float32)
        bp = np.asarray(layer.bh[nt, 0, :out_sz], np.float32)
        wv = np.asarray(layer.wh[nt, :hidden_size, layer.val_col], np.float32)
        bv = np.asarray(layer.bh[nt, 0, layer.val_col], np.float32)
        h = np.maximum(xs @ w1 + b1, 0.0)
        logits = h @ wp + bp
        logits = logits - logits.max(-1, keepdims=True)
        e = np.exp(logits)
        ref_pol[idx[:, None], np.arange(out_sz)[None, :]] = e / e.sum(-1, keepdims=True)
        ref_val[idx] = h @ wv + bv

    assert np.allclose(np.asarray(policy), ref_pol, atol=2e-2), "policy mismatch"
    assert np.allclose(np.asarray(value), ref_val, atol=2e-2), "value mismatch"

    # ------------------------- dueling-DQN mode -------------------------
    dlayer = ActorCriticLayerPallas(num_node_types, input_size, hidden_size,
                                    output_sizes, kp2, dueling_dqn=True)
    dfwd = jax.jit(dlayer.__call__)
    q_out, _ = dfwd(x, node_type)
    jax.block_until_ready(q_out)

    ref_q = np.zeros((node_type.shape[0], max_out), np.float32)
    for nt in range(num_node_types):
        idx = np.nonzero(nt_np == nt)[0]
        out_sz = output_sizes[nt]
        xs = np.asarray(x[nt], np.float32)
        w1 = np.asarray(dlayer.w1[nt, :input_size, :hidden_size], np.float32)
        b1 = np.asarray(dlayer.b1[nt, 0, :hidden_size], np.float32)
        wp = np.asarray(dlayer.wh[nt, :hidden_size, :out_sz], np.float32)
        bp = np.asarray(dlayer.bh[nt, 0, :out_sz], np.float32)
        wv = np.asarray(dlayer.wh[nt, :hidden_size, dlayer.val_col], np.float32)
        bv = np.asarray(dlayer.bh[nt, 0, dlayer.val_col], np.float32)
        h = np.maximum(xs @ w1 + b1, 0.0)
        adv = h @ wp + bp
        val = (h @ wv + bv)[:, None]
        ref_q[idx[:, None], np.arange(out_sz)[None, :]] = val + adv - adv.mean()

    assert np.allclose(np.asarray(q_out), ref_q, atol=2e-2), "dueling Q mismatch"

    print("KERNEL_OK")
</pallas_src>

<mosaic_0001>
module attributes {stable_mosaic.version = 11 : i64} {
  func.func @_actor_critic_kernel(%arg0: i32, %arg1: i32, %arg2: memref<2xi32, #tpu.memory_space<smem>>, %arg3: memref<2xi32, #tpu.memory_space<smem>>, %arg4: memref<1x8x128xf32, #tpu.memory_space<vmem>>, %arg5: memref<1x128x128xf32, #tpu.memory_space<vmem>>, %arg6: memref<1x1x128xf32, #tpu.memory_space<vmem>>, %arg7: memref<1x128x128xf32, #tpu.memory_space<vmem>>, %arg8: memref<1x1x128xf32, #tpu.memory_space<vmem>>, %arg9: memref<1x8x128xf32, #tpu.memory_space<vmem>>) attributes {dimension_semantics = [#tpu.dimension_semantics<parallel>, #tpu.dimension_semantics<parallel>], iteration_bounds = array<i64: 2, 1>, scalar_prefetch = 2 : i64, scratch_operands = 0 : i64, tpu.core_type = #tpu.core_type<tc>, window_params = [{transform_indices = @transform_0, window_bounds = array<i64: 1, 8, 128>}, {transform_indices = @transform_1, window_bounds = array<i64: 1, 128, 128>}, {transform_indices = @transform_2, window_bounds = array<i64: 1, 1, 128>}, {transform_indices = @transform_3, window_bounds = array<i64: 1, 128, 128>}, {transform_indices = @transform_4, window_bounds = array<i64: 1, 1, 128>}, {transform_indices = @transform_5, window_bounds = array<i64: 1, 8, 128>}]} {
    %c0 = arith.constant 0 : index
    %c0_0 = arith.constant 0 : index
    %c0_1 = arith.constant 0 : index
    %0 = vector.load %arg4[%c0, %c0_0, %c0_1] : memref<1x8x128xf32, #tpu.memory_space<vmem>>, vector<1x8x128xf32>
    %1 = vector.shape_cast %0 : vector<1x8x128xf32> to vector<8x128xf32>
    %c0_2 = arith.constant 0 : index
    %c0_3 = arith.constant 0 : index
    %c0_4 = arith.constant 0 : index
    %2 = vector.load %arg5[%c0_2, %c0_3, %c0_4] : memref<1x128x128xf32, #tpu.memory_space<vmem>>, vector<1x128x128xf32>
    %3 = vector.shape_cast %2 : vector<1x128x128xf32> to vector<128x128xf32>
    %cst = arith.constant dense<0.000000e+00> : vector<8x128xf32>
    %4 = tpu.matmul %1, %3, %cst {dimension_numbers = #tpu.dot_dimension_numbers<[1], [0], [0], [1], [0, 0, 1, 1], [], []>} : vector<8x128xf32>, vector<128x128xf32>, vector<8x128xf32> -> vector<8x128xf32>
    %c0_5 = arith.constant 0 : index
    %c0_6 = arith.constant 0 : index
    %c0_7 = arith.constant 0 : index
    %5 = vector.load %arg6[%c0_5, %c0_6, %c0_7] : memref<1x1x128xf32, #tpu.memory_space<vmem>>, vector<1x1x128xf32>
    %6 = vector.shape_cast %5 : vector<1x1x128xf32> to vector<1x128xf32>
    %7 = vector.broadcast %6 : vector<1x128xf32> to vector<8x128xf32>
    %8 = arith.addf %4, %7 : vector<8x128xf32>
    %cst_8 = arith.constant 0.000000e+00 : f32
    %9 = vector.broadcast %cst_8 : f32 to vector<8x128xf32>
    %10 = arith.maximumf %8, %9 : vector<8x128xf32>
    %c0_9 = arith.constant 0 : index
    %c0_10 = arith.constant 0 : index
    %c0_11 = arith.constant 0 : index
    %11 = vector.load %arg7[%c0_9, %c0_10, %c0_11] : memref<1x128x128xf32, #tpu.memory_space<vmem>>, vector<1x128x128xf32>
    %12 = vector.shape_cast %11 : vector<1x128x128xf32> to vector<128x128xf32>
    %cst_12 = arith.constant dense<0.000000e+00> : vector<8x128xf32>
    %13 = tpu.matmul %10, %12, %cst_12 {dimension_numbers = #tpu.dot_dimension_numbers<[1], [0], [0], [1], [0, 0, 1, 1], [], []>} : vector<8x128xf32>, vector<128x128xf32>, vector<8x128xf32> -> vector<8x128xf32>
    %c0_13 = arith.constant 0 : index
    %c0_14 = arith.constant 0 : index
    %c0_15 = arith.constant 0 : index
    %14 = vector.load %arg8[%c0_13, %c0_14, %c0_15] : memref<1x1x128xf32, #tpu.memory_space<vmem>>, vector<1x1x128xf32>
    %15 = vector.shape_cast %14 : vector<1x1x128xf32> to vector<1x128xf32>
    %16 = vector.broadcast %15 : vector<1x128xf32> to vector<8x128xf32>
    %17 = arith.addf %13, %16 : vector<8x128xf32>
    %18 = arith.index_cast %arg0 : i32 to index
    %19 = memref.load %arg2[%18] : memref<2xi32, #tpu.memory_space<smem>>
    %20 = tpu.iota {dimensions = array<i32: 1>} : vector<8x128xi32>
    %21 = vector.broadcast %19 : i32 to vector<8x128xi32>
    %22 = arith.cmpi slt, %20, %21 : vector<8x128xi32>
    %c127_i32 = arith.constant 127 : i32
    %23 = vector.broadcast %c127_i32 : i32 to vector<8x128xi32>
    %24 = arith.cmpi eq, %20, %23 : vector<8x128xi32>
    %cst_16 = arith.constant 0.000000e+00 : f32
    %25 = vector.broadcast %cst_16 : f32 to vector<8x128xf32>
    %26 = arith.select %24, %17, %25 : vector<8x128xi1>, vector<8x128xf32>
    %cst_17 = arith.constant 0xFF800000 : f32
    %27 = vector.broadcast %cst_17 : f32 to vector<8x128xf32>
    %28 = arith.select %22, %17, %27 : vector<8x128xi1>, vector<8x128xf32>
    %cst_18 = arith.constant dense<0xFF800000> : vector<8xf32>
    %29 = vector.multi_reduction <maximumf>, %28, %cst_18 [1] : vector<8x128xf32> to vector<8xf32>
    %30 = vector.shape_cast %29 : vector<8xf32> to vector<8x1xf32>
    %31 = vector.broadcast %30 : vector<8x1xf32> to vector<8x128xf32>
    %32 = arith.subf %28, %31 : vector<8x128xf32>
    %33 = math.exp %32 : vector<8x128xf32>
    %cst_19 = arith.constant dense<0.000000e+00> : vector<8xf32>
    %34 = vector.multi_reduction <add>, %33, %cst_19 [1] : vector<8x128xf32> to vector<8xf32>
    %35 = vector.shape_cast %34 : vector<8xf32> to vector<8x1xf32>
    %36 = tpu.reciprocal %35 {approx = true} : vector<8x1xf32> -> vector<8x1xf32>
    %37 = vector.broadcast %36 : vector<8x1xf32> to vector<8x128xf32>
    %38 = arith.mulf %33, %37 : vector<8x128xf32>
    %39 = arith.addf %38, %26 : vector<8x128xf32>
    %c0_20 = arith.constant 0 : index
    %c0_21 = arith.constant 0 : index
    %c0_22 = arith.constant 0 : index
    %40 = vector.load %arg9[%c0_20, %c0_21, %c0_22] : memref<1x8x128xf32, #tpu.memory_space<vmem>>, vector<1x8x128xf32>
    %41 = vector.shape_cast %40 : vector<1x8x128xf32> to vector<8x128xf32>
    %42 = vector.shape_cast %39 : vector<8x128xf32> to vector<1x8x128xf32>
    tpu.vector_store %arg9[%c0_20, %c0_21, %c0_22], %42 {strides = array<i32>} : memref<1x8x128xf32, #tpu.memory_space<vmem>>, vector<1x8x128xf32>,
    return
  }
  func.func @transform_0(%arg0: i32, %arg1: i32, %arg2: memref<2xi32, #tpu.memory_space<smem>>, %arg3: memref<2xi32, #tpu.memory_space<smem>>) -> (i32, i32, i32) {
    %c0_i32 = arith.constant 0 : i32
    %c0_i32_0 = arith.constant 0 : i32
    return %arg0, %arg1, %c0_i32 : i32, i32, i32
  }
  func.func @transform_1(%arg0: i32, %arg1: i32, %arg2: memref<2xi32, #tpu.memory_space<smem>>, %arg3: memref<2xi32, #tpu.memory_space<smem>>) -> (i32, i32, i32) {
    %c0_i32 = arith.constant 0 : i32
    %c0_i32_0 = arith.constant 0 : i32
    %c0_i32_1 = arith.constant 0 : i32
    return %arg0, %c0_i32, %c0_i32_0 : i32, i32, i32
  }
  func.func @transform_2(%arg0: i32, %arg1: i32, %arg2: memref<2xi32, #tpu.memory_space<smem>>, %arg3: memref<2xi32, #tpu.memory_space<smem>>) -> (i32, i32, i32) {
    %c0_i32 = arith.constant 0 : i32
    %c0_i32_0 = arith.constant 0 : i32
    %c0_i32_1 = arith.constant 0 : i32
    return %arg0, %c0_i32, %c0_i32_0 : i32, i32, i32
  }
  func.func @transform_3(%arg0: i32, %arg1: i32, %arg2: memref<2xi32, #tpu.memory_space<smem>>, %arg3: memref<2xi32, #tpu.memory_space<smem>>) -> (i32, i32, i32) {
    %c0_i32 = arith.constant 0 : i32
    %c0_i32_0 = arith.constant 0 : i32
    %c0_i32_1 = arith.constant 0 : i32
    return %arg0, %c0_i32, %c0_i32_0 : i32, i32, i32
  }
  func.func @transform_4(%arg0: i32, %arg1: i32, %arg2: memref<2xi32, #tpu.memory_space<smem>>, %arg3: memref<2xi32, #tpu.memory_space<smem>>) -> (i32, i32, i32) {
    %c0_i32 = arith.constant 0 : i32
    %c0_i32_0 = arith.constant 0 : i32
    %c0_i32_1 = arith.constant 0 : i32
    return %arg0, %c0_i32, %c0_i32_0 : i32, i32, i32
  }
  func.func @transform_5(%arg0: i32, %arg1: i32, %arg2: memref<2xi32, #tpu.memory_space<smem>>, %arg3: memref<2xi32, #tpu.memory_space<smem>>) -> (i32, i32, i32) {
    %c0_i32 = arith.constant 0 : i32
    %c0_i32_0 = arith.constant 0 : i32
    return %arg0, %arg1, %c0_i32 : i32, i32, i32
  }
}

</mosaic_0001>

<llo_original>
// kernel: a_call__.1
$region0: #{a_call__.1}
  #allocation0 [shape = 'u32[]', space=smem, size = 0x4, offset = 0x4, fixed_abs, tag = 'smem constant byte address 0x4 - core index']
  #allocation1 [shape = 'u32[144,128]{1,0:T(1,128)}', space=vmem, size = 0x12000, scoped, tag = 'internal scratch']
  #allocation2 [shape = 's32[1]{0}', space=sflag, size = 0x4, scoped, tag = 'scoped memory for a_call__.1']
  #allocation3 [shape = 'u8[512]{0}', space=smem, size = 0x200, scoped, tag = 'prefetched SMEM operand 0']
  #allocation4 [shape = 'u8[512]{0}', space=smem, size = 0x200, scoped, tag = 'prefetched SMEM operand 1']
  %s0 = inlined_call_operand.vmem [shape: s32[2], index: 0, kind: input, shape index: {}]
  %s1 = inlined_call_operand.vmem [shape: s32[2], index: 1, kind: input, shape index: {}]
  %s2 = inlined_call_operand.vmem [shape: f32[2,8,128], index: 2, kind: input, shape index: {}]
  %s3 = inlined_call_operand.hbm [shape: f32[2,128,128], index: 3, kind: input, shape index: {}]
  %s4 = inlined_call_operand.vmem [shape: f32[2,1,128], index: 4, kind: input, shape index: {}]
  %s5 = inlined_call_operand.hbm [shape: f32[2,128,128], index: 5, kind: input, shape index: {}]
  %s6 = inlined_call_operand.vmem [shape: f32[2,1,128], index: 6, kind: input, shape index: {}]
  %s7 = inlined_call_operand.vmem [shape: f32[2,8,128], index: 7, kind: output, shape index: {}]
  %s8 = sld [smem:[#allocation0]]
  $region61: #{a_call__.1} parent=0
    _
  %s10 = ssub.s32 1, %s8
  %s11 = scalar_select 0, %s10, %s8
  %s12 = sshll.u32 %s0, 4
  %s13 = int_to_ptr.vmem [resolvable:$true] %s12
  %15 = dma.vmem_to_smem %s13, 16, [#allocation3], [#allocation2]
  %s16 = sshll.u32 %s1, 4
  %s17 = int_to_ptr.vmem [resolvable:$true] %s16
  %19 = dma.vmem_to_smem %s17, 16, [#allocation4], [#allocation2]
  %20 = dma.done [#allocation2], 32
  %21 = sfence
  $region1: #{a_call__.1} parent=0
    #allocation5 [shape = 'u8[131072]{0}', space=vmem, size = 0x20000, scoped, tag = 'input window, operand 3']
    #allocation6 [shape = 's32[2]{0}', space=sflag, size = 0x8, scoped, tag = 'scoped memory for a_call__.1']
    #allocation7 [shape = 'u8[131072]{0}', space=vmem, size = 0x20000, scoped, tag = 'input window, operand 5']
    #allocation8 [shape = 's32[2]{0}', space=sflag, size = 0x8, scoped, tag = 'scoped memory for a_call__.1']
    %22 = vsyncpa [#allocation6], 0
    %s23 = scalar_lea.sflag [#allocation6], 1
    %24 = vsyncpa %s23, 0
    %25 = vsyncpa [#allocation8], 0
    %s26 = scalar_lea.sflag [#allocation8], 1
    %27 = vsyncpa %s26, 0
    loop: start=0, step=1, limit=4
    $region2: #{a_call__.1} parent=1 // loop_pre_header
      _
    $region3: #{a_call__.1} parent=1 // loop_header
      %s29 = sphi 0, %s33
      %p30 = scmp.ge.s32.totalorder %s29, 4
      %s36 = sphi 0, %s48
      %s37 = sphi 0, %s44
      %s38 = sphi 0, %s36
      %s39 = sphi 0, %s37
      %s40 = sphi 0, %s38
      %s41 = sphi 0, %s39
      %s53 = sphi 0, %s55
      %s56 = sphi 0, %s53
      %s57 = sphi 0, %s56
      %s73 = sphi 0, %s57
      %s79 = sphi 0, %s81
      %s82 = sphi 0, %s79
      %s83 = sphi 0, %s82
      %s99 = sphi 0, %s83
      %s105 = sphi 0, %s107
      %s108 = sphi 0, %s105
      %s109 = sphi 0, %s108
      %s125 = sphi 0, %s109
      %s131 = sphi 0, %s133
      %s134 = sphi 0, %s131
      %s135 = sphi 0, %s134
      %s151 = sphi 0, %s135
      %s157 = sphi 0, %s159
      %s160 = sphi 0, %s157
      %s161 = sphi 0, %s160
      %s177 = sphi 0, %s161
      %s185 = sphi 0, %s187
      %s188 = sphi 0, %s185
      %s189 = sphi 0, %s188
      %s205 = sphi 0, %s189
    $region4: #{a_call__.1} parent=1 // loop_header_branch
      %32 = sbr.rel (%p30) target = $region8
    $region5: #{a_call__.1} parent=1 // loop_body
      %s34 = ssub.s32 %s29, 1
      %s35 = ssub.s32 %s29, 2
      %s42 = sadd.s32 1, %s37
      %p43 = scmp.ge.s32.totalorder %s42, 1
      %s44 = scalar_select %p43, 0, %s42
      %s45 = sadd.s32 1, %s36
      %s46 = scalar_select %p43, %s45, %s36
      %p47 = scmp.ge.s32.totalorder %s46, 2
      %s48 = scalar_select %p47, 0, %s46
      %s49 = ssub.s32 %s36, %s48
      %s50 = ssub.s32 %s37, %s44
      %s51 = sor.u32 %s49, %s50
      %p52 = scmp.eq.s32.totalorder %s51, 0
      %s54 = sadd.s32 %s53, 1
      %s55 = scalar_select %p52, %s53, %s54
      %p58 = pneg %p52
      %p59 = scmp.eq.s32.totalorder %s29, 1
      %p60 = por %p58, %p59
      %p61 = scmp.ne.s32.totalorder %s53, %s56
      %p62 = scmp.eq.s32.totalorder %s29, 0
      %p63 = por %p61, %p62
      %p64 = scmp.ne.s32.totalorder %s53, %s56
      %p65 = scmp.eq.s32.totalorder %s34, 1
      %p66 = por %p64, %p65
      %p67 = scmp.ne.s32.totalorder %s56, %s57
      %p68 = scmp.eq.s32.totalorder %s34, 0
      %p69 = por %p67, %p68
      %p70 = scmp.ne.s32.totalorder %s56, %s57
      %p71 = scmp.eq.s32.totalorder %s35, 1
      %p72 = por %p70, %p71
      %p74 = scmp.ne.s32.totalorder %s57, %s73
      %p75 = scmp.eq.s32.totalorder %s35, 0
      %p76 = por %p74, %p75
      %s77 = ssub.s32 %s36, %s48
      %p78 = scmp.eq.s32.totalorder %s77, 0
      %s80 = sadd.s32 %s79, 1
      %s81 = scalar_select %p78, %s79, %s80
      %p84 = pneg %p78
      %p85 = scmp.eq.s32.totalorder %s29, 1
      %p86 = por %p84, %p85
      %p87 = scmp.ne.s32.totalorder %s79, %s82
      %p88 = scmp.eq.s32.totalorder %s29, 0
      %p89 = por %p87, %p88
      %p90 = scmp.ne.s32.totalorder %s79, %s82
      %p91 = scmp.eq.s32.totalorder %s34, 1
      %p92 = por %p90, %p91
      %p93 = scmp.ne.s32.totalorder %s82, %s83
      %p94 = scmp.eq.s32.totalorder %s34, 0
      %p95 = por %p93, %p94
      %p96 = scmp.ne.s32.totalorder %s82, %s83
      %p97 = scmp.eq.s32.totalorder %s35, 1
      %p98 = por %p96, %p97
      %p100 = scmp.ne.s32.totalorder %s83, %s99
      %p101 = scmp.eq.s32.totalorder %s35, 0
      %p102 = por %p100, %p101
      %s103 = ssub.s32 %s36, %s48
      %p104 = scmp.eq.s32.totalorder %s103, 0
      %s106 = sadd.s32 %s105, 1
      %s107 = scalar_select %p104, %s105, %s106
      %p110 = pneg %p104
      %p111 = scmp.eq.s32.totalorder %s29, 1
      %p112 = por %p110, %p111
      %p113 = scmp.ne.s32.totalorder %s105, %s108
      %p114 = scmp.eq.s32.totalorder %s29, 0
      %p115 = por %p113, %p114
      %p116 = scmp.ne.s32.totalorder %s105, %s108
      %p117 = scmp.eq.s32.totalorder %s34, 1
      %p118 = por %p116, %p117
      %p119 = scmp.ne.s32.totalorder %s108, %s109
      %p120 = scmp.eq.s32.totalorder %s34, 0
      %p121 = por %p119, %p120
      %p122 = scmp.ne.s32.totalorder %s108, %s109
      %p123 = scmp.eq.s32.totalorder %s35, 1
      %p124 = por %p122, %p123
      %p126 = scmp.ne.s32.totalorder %s109, %s125
      %p127 = scmp.eq.s32.totalorder %s35, 0
      %p128 = por %p126, %p127
      %s129 = ssub.s32 %s36, %s48
      %p130 = scmp.eq.s32.totalorder %s129, 0
      %s132 = sadd.s32 %s131, 1
      %s133 = scalar_select %p130, %s131, %s132
      %p136 = pneg %p130
      %p137 = scmp.eq.s32.totalorder %s29, 1
      %p138 = por %p136, %p137
      %p139 = scmp.ne.s32.totalorder %s131, %s134
      %p140 = scmp.eq.s32.totalorder %s29, 0
      %p141 = por %p139, %p140
      %p142 = scmp.ne.s32.totalorder %s131, %s134
      %p143 = scmp.eq.s32.totalorder %s34, 1
      %p144 = por %p142, %p143
      %p145 = scmp.ne.s32.totalorder %s134, %s135
      %p146 = scmp.eq.s32.totalorder %s34, 0
      %p147 = por %p145, %p146
      %p148 = scmp.ne.s32.totalorder %s134, %s135
      %p149 = scmp.eq.s32.totalorder %s35, 1
      %p150 = por %p148, %p149
      %p152 = scmp.ne.s32.totalorder %s135, %s151
      %p153 = scmp.eq.s32.totalorder %s35, 0
      %p154 = por %p152, %p153
      %s155 = ssub.s32 %s36, %s48
      %p156 = scmp.eq.s32.totalorder %s155, 0
      %s158 = sadd.s32 %s157, 1
      %s159 = scalar_select %p156, %s157, %s158
      %p162 = pneg %p156
      %p163 = scmp.eq.s32.totalorder %s29, 1
      %p164 = por %p162, %p163
      %p165 = scmp.ne.s32.totalorder %s157, %s160
      %p166 = scmp.eq.s32.totalorder %s29, 0
      %p167 = por %p165, %p166
      %p168 = scmp.ne.s32.totalorder %s157, %s160
      %p169 = scmp.eq.s32.totalorder %s34, 1
      %p170 = por %p168, %p169
      %p171 = scmp.ne.s32.totalorder %s160, %s161
      %p172 = scmp.eq.s32.totalorder %s34, 0
      %p173 = por %p171, %p172
      %p174 = scmp.ne.s32.totalorder %s160, %s161
      %p175 = scmp.eq.s32.totalorder %s35, 1
      %p176 = por %p174, %p175
      %p178 = scmp.ne.s32.totalorder %s161, %s177
      %p179 = scmp.eq.s32.totalorder %s35, 0
      %p180 = por %p178, %p179
      %s181 = ssub.s32 %s36, %s48
      %s182 = ssub.s32 %s37, %s44
      %s183 = sor.u32 %s181, %s182
      %p184 = scmp.eq.s32.totalorder %s183, 0
      %s186 = sadd.s32 %s185, 1
      %s187 = scalar_select %p184, %s185, %s186
      %p190 = pneg %p184
      %p191 = scmp.eq.s32.totalorder %s29, 1
      %p192 = por %p190, %p191
      %p193 = scmp.ne.s32.totalorder %s185, %s188
      %p194 = scmp.eq.s32.totalorder %s29, 0
      %p195 = por %p193, %p194
      %p196 = scmp.ne.s32.totalorder %s185, %s188
      %p197 = scmp.eq.s32.totalorder %s34, 1
      %p198 = por %p196, %p197
      %p199 = scmp.ne.s32.totalorder %s188, %s189
      %p200 = scmp.eq.s32.totalorder %s34, 0
      %p201 = por %p199, %p200
      %p202 = scmp.ne.s32.totalorder %s188, %s189
      %p203 = scmp.eq.s32.totalorder %s35, 1
      %p204 = por %p202, %p203
      %p206 = scmp.ne.s32.totalorder %s189, %s205
      %p207 = scmp.eq.s32.totalorder %s35, 0
      %p208 = por %p206, %p207
      %p209 = scmp.le.s32.totalorder 1, %s29
      %p210 = scmp.lt.s32.totalorder %s29, 3
      %p211 = pnand %p209, %p210
      %p212 = pneg %p211
      // Predicated region
      $region9: #{a_call__.1} parent=5 // pred_check
        _
      $region10: #{a_call__.1} parent=5 // pred_check_branch
        %214 = sbr.rel (%p211) target = $region12
      $region11: #{a_call__.1} parent=5 // pred_region
        %s215 = ssub.s32 %s29, 1
      $region12: #{a_call__.1} parent=5 // pred_fallthru
        _
      %p216 = scmp.lt.s32.totalorder %s29, 2
      // Predicated region
      $region13: #{a_call__.1} parent=5 // pred_check
        %p217 = pneg %p216
      $region14: #{a_call__.1} parent=5 // pred_check_branch
        %219 = sbr.rel (%p217) target = $region16
      $region15: #{a_call__.1} parent=5 // pred_region
        // Predicated region
        $region17: #{a_call__.1} parent=15 // pred_check
          %p220 = pneg %p63
        $region18: #{a_call__.1} parent=15 // pred_check_branch
          %222 = sbr.rel (%p220) target = $region20
        $region19: #{a_call__.1} parent=15 // pred_region
          %p223 = scmp.lt.s32.totalorder %s36, 1
          %s224 = scalar_select %p223, %s36, 1
          %p225 = scmp.lt.s32.totalorder %s37, 0
          %s226 = scalar_select %p225, %s37, 0
          %s227 = sadd.s32 %s226, %s224
          %s228 = smul.addr %s227, 8
          %s229 = scalar_lea.vmem %s2, %s228
        $region20: #{a_call__.1} parent=15 // pred_fallthru
          _
        // Predicated region
        $region21: #{a_call__.1} parent=15 // pred_check
          %p230 = pneg %p89
        $region22: #{a_call__.1} parent=15 // pred_check_branch
          %232 = sbr.rel (%p230) target = $region24
        $region23: #{a_call__.1} parent=15 // pred_region
          %s233 = sand.u32 %s79, 1
          %s234 = scalar_lea.sflag [#allocation6], %s233
          %s235 = sand.u32 %s79, 1
          %s236 = smul.addr %s235, 128
          %s237 = scalar_lea.vmem [#allocation5], %s236
          %s239 = ssub.s32 2048, 2048
          %240 = vsyncadd %s234, %s239
          %s241 = smul.addr %s36, 16
          %s242 = smul.addr %s241, 128
          %s243 = scalar_lea.hbm %s3, %s242
          %s244 = sshll.u32 %s237, 4
          %s245 = int_to_ptr.vmem [resolvable:$true] %s244
          %250 = dma.hbm_to_vmem [thread:$0]  %s243, 2048, %s245, %s234, 128, 128, 8
        $region24: #{a_call__.1} parent=15 // pred_fallthru
          _
        // Predicated region
        $region25: #{a_call__.1} parent=15 // pred_check
          %p251 = pneg %p115
        $region26: #{a_call__.1} parent=15 // pred_check_branch
          %253 = sbr.rel (%p251) target = $region28
        $region27: #{a_call__.1} parent=15 // pred_region
          %p254 = scmp.lt.s32.totalorder %s36, 1
          %s255 = scalar_select %p254, %s36, 1
          %s256 = scalar_lea.vmem %s4, %s255
        $region28: #{a_call__.1} parent=15 // pred_fallthru
          _
        // Predicated region
        $region29: #{a_call__.1} parent=15 // pred_check
          %p257 = pneg %p141
        $region30: #{a_call__.1} parent=15 // pred_check_branch
          %259 = sbr.rel (%p257) target = $region32
        $region31: #{a_call__.1} parent=15 // pred_region
          %s260 = sand.u32 %s131, 1
          %s261 = scalar_lea.sflag [#allocation8], %s260
          %s262 = sand.u32 %s131, 1
          %s263 = smul.addr %s262, 128
          %s264 = scalar_lea.vmem [#allocation7], %s263
          %s266 = ssub.s32 2048, 2048
          %267 = vsyncadd %s261, %s266
          %s268 = smul.addr %s36, 16
          %s269 = smul.addr %s268, 128
          %s270 = scalar_lea.hbm %s5, %s269
          %s271 = sshll.u32 %s264, 4
          %s272 = int_to_ptr.vmem [resolvable:$true] %s271
          %277 = dma.hbm_to_vmem [thread:$0]  %s270, 2048, %s272, %s261, 128, 128, 8
        $region32: #{a_call__.1} parent=15 // pred_fallthru
          _
        // Predicated region
        $region33: #{a_call__.1} parent=15 // pred_check
          %p278 = pneg %p167
        $region34: #{a_call__.1} parent=15 // pred_check_branch
          %280 = sbr.rel (%p278) target = $region36
        $region35: #{a_call__.1} parent=15 // pred_region
          %p281 = scmp.lt.s32.totalorder %s36, 1
          %s282 = scalar_select %p281, %s36, 1
          %s283 = scalar_lea.vmem %s6, %s282
        $region36: #{a_call__.1} parent=15 // pred_fallthru
          _
      $region16: #{a_call__.1} parent=5 // pred_fallthru
        _
      %p284 = scmp.le.s32.totalorder 1, %s29
      %p285 = scmp.lt.s32.totalorder %s29, 3
      %p286 = pnand %p284, %p285
      %p287 = pneg %p286
      // Predicated region
      $region37: #{a_call__.1} parent=5 // pred_check
        _
      $region38: #{a_call__.1} parent=5 // pred_check_branch
        %289 = sbr.rel (%p286) target = $region40
      $region39: #{a_call__.1} parent=5 // pred_region
        %s290 = ssub.s32 %s29, 1
        %s291 = sand.u32 %s82, 1
        %s292 = scalar_lea.sflag [#allocation6], %s291
        %s293 = sand.u32 %s82, 1
        %s294 = smul.addr %s293, 128
        %s295 = scalar_lea.vmem [#allocation5], %s294
        // Predicated region
        $region41: #{a_call__.1} parent=39 // pred_check
          %p296 = pneg %p95
        $region42: #{a_call__.1} parent=39 // pred_check_branch
          %298 = sbr.rel (%p296) target = $region44
        $region43: #{a_call__.1} parent=39 // pred_region
          %299 = dma.done %s292, 2048
        $region44: #{a_call__.1} parent=39 // pred_fallthru
          _
        %s300 = sand.u32 %s134, 1
        %s301 = scalar_lea.sflag [#allocation8], %s300
        %s302 = sand.u32 %s134, 1
        %s303 = smul.addr %s302, 128
        %s304 = scalar_lea.vmem [#allocation7], %s303
        // Predicated region
        $region45: #{a_call__.1} parent=39 // pred_check
          %p305 = pneg %p147
        $region46: #{a_call__.1} parent=39 // pred_check_branch
          %307 = sbr.rel (%p305) target = $region48
        $region47: #{a_call__.1} parent=39 // pred_region
          %308 = dma.done %s301, 2048
        $region48: #{a_call__.1} parent=39 // pred_fallthru
          _
        %p309 = scmp.lt.s32.totalorder %s38, 1
        %s310 = scalar_select %p309, %s38, 1
        %p311 = scmp.lt.s32.totalorder %s39, 0
        %s312 = scalar_select %p311, %s39, 0
        %s313 = sadd.s32 %s312, %s310
        %s314 = smul.addr %s313, 8
        %s315 = scalar_lea.vmem %s2, %s314
        %p316 = pneg %p69
        %p317 = pneg %p66
        %s318 = sand.u32 %s82, 1
        %s319 = scalar_lea.sflag [#allocation6], %s318
        %s320 = sand.u32 %s82, 1
        %s321 = smul.addr %s320, 128
        %s322 = scalar_lea.vmem [#allocation5], %s321
        %p323 = pneg %p95
        %p324 = pneg %p92
        %p325 = scmp.lt.s32.totalorder %s38, 1
        %s326 = scalar_select %p325, %s38, 1
        %s327 = scalar_lea.vmem %s4, %s326
        %p328 = pneg %p121
        %p329 = pneg %p118
        %s330 = sand.u32 %s134, 1
        %s331 = scalar_lea.sflag [#allocation8], %s330
        %s332 = sand.u32 %s134, 1
        %s333 = smul.addr %s332, 128
        %s334 = scalar_lea.vmem [#allocation7], %s333
        %p335 = pneg %p147
        %p336 = pneg %p144
        %p337 = scmp.lt.s32.totalorder %s38, 1
        %s338 = scalar_select %p337, %s38, 1
        %s339 = scalar_lea.vmem %s6, %s338
        %p340 = pneg %p173
        %p341 = pneg %p170
        %p342 = pneg %p201
        %p343 = pneg %p198
        %p344 = scmp.lt.s32.totalorder %s38, 1
        %s345 = scalar_select %p344, %s38, 1
        %p346 = scmp.lt.s32.totalorder %s39, 0
        %s347 = scalar_select %p346, %s39, 0
        %s348 = sadd.s32 %s347, %s345
        %s349 = smul.addr %s348, 8
        %s350 = scalar_lea.vmem %s7, %s349
        %p351 = scmp.lt.s32.totalorder %s38, 1
        %s352 = scalar_select %p351, %s38, 1
        %p353 = scmp.lt.s32.totalorder %s39, 0
        %s354 = scalar_select %p353, %s39, 0
        %s355 = sadd.s32 %s354, %s352
        %s356 = smul.addr %s355, 8
        %s357 = scalar_lea.vmem %s2, %s356
        %p358 = scmp.lt.s32.totalorder %s38, 1
        %s359 = scalar_select %p358, %s38, 1
        %s360 = scalar_lea.vmem %s4, %s359
        %p361 = scmp.lt.s32.totalorder %s38, 1
        %s362 = scalar_select %p361, %s38, 1
        %s363 = scalar_lea.vmem %s6, %s362
        %p364 = scmp.lt.s32.totalorder %s38, 1
        %s365 = scalar_select %p364, %s38, 1
        %p366 = scmp.lt.s32.totalorder %s39, 0
        %s367 = scalar_select %p366, %s39, 0
        %s368 = sadd.s32 %s367, %s365
        %s369 = smul.addr %s368, 8
        %s370 = scalar_lea.vmem %s7, %s369
        %v371 = vld [vmem:[%s357] sm:$0xff]
        %v372 = vld [vmem:[%s295] sm:$0xff]
        %v373 = vld [vmem:[%s295 + $0x8] sm:$0xff]
        %v374 = vld [vmem:[%s295 + $0x10] sm:$0xff]
        %v375 = vld [vmem:[%s295 + $0x18] sm:$0xff]
        %v376 = vld [vmem:[%s295 + $0x20] sm:$0xff]
        %v377 = vld [vmem:[%s295 + $0x28] sm:$0xff]
        %v378 = vld [vmem:[%s295 + $0x30] sm:$0xff]
        %v379 = vld [vmem:[%s295 + $0x38] sm:$0xff]
        %v380 = vld [vmem:[%s295 + $0x40] sm:$0xff]
        %v381 = vld [vmem:[%s295 + $0x48] sm:$0xff]
        %v382 = vld [vmem:[%s295 + $0x50] sm:$0xff]
        %v383 = vld [vmem:[%s295 + $0x58] sm:$0xff]
        %v384 = vld [vmem:[%s295 + $0x60] sm:$0xff]
        %v385 = vld [vmem:[%s295 + $0x68] sm:$0xff]
        %v386 = vld [vmem:[%s295 + $0x70] sm:$0xff]
        %v387 = vld [vmem:[%s295 + $0x78] sm:$0xff]
        %v388 = vld [vmem:[%s360] sm:$0x1]
        %v390 = vlaneseq
        %v391 = vshrl.u32 %v390, 7
        %v392 = vsub.s32 0, %v391
        %v393 = vrot.slane %v388, %v392
        %395 = vmatprep.subr.mxu0 0.0
        %396 = vmatpush1.msra.mxu0 %v387
        %397 = vmatprep.subr.mxu0 0.0
        %398 = vmatpush1.msra.mxu0 %v386
        %399 = vmatprep.subr.mxu0 0.0
        %400 = vmatpush1.msra.mxu0 %v385
        %401 = vmatprep.subr.mxu0 0.0
        %402 = vmatpush1.msra.mxu0 %v384
        %403 = vmatprep.subr.mxu0 0.0
        %404 = vmatpush1.msra.mxu0 %v383
        %405 = vmatprep.subr.mxu0 0.0
        %406 = vmatpush1.msra.mxu0 %v382
        %407 = vmatprep.subr.mxu0 0.0
        %408 = vmatpush1.msra.mxu0 %v381
        %409 = vmatprep.subr.mxu0 0.0
        %410 = vmatpush1.msra.mxu0 %v380
        %411 = vmatprep.subr.mxu0 0.0
        %412 = vmatpush1.msra.mxu0 %v379
        %413 = vmatprep.subr.mxu0 0.0
        %414 = vmatpush1.msra.mxu0 %v378
        %415 = vmatprep.subr.mxu0 0.0
        %416 = vmatpush1.msra.mxu0 %v377
        %417 = vmatprep.subr.mxu0 0.0
        %418 = vmatpush1.msra.mxu0 %v376
        %419 = vmatprep.subr.mxu0 0.0
        %420 = vmatpush1.msra.mxu0 %v375
        %421 = vmatprep.subr.mxu0 0.0
        %422 = vmatpush1.msra.mxu0 %v374
        %423 = vmatprep.subr.mxu0 0.0
        %424 = vmatpush1.msra.mxu0 %v373
        %425 = vmatprep.subr.mxu0 0.0
        %426 = vmatpush1.msra.mxu0 %v372
        %427 = vmatprep.subr.mxu0 0.0
        %428 = vmatpush2.msra.mxu0 0.0
        %429 = vmatprep.subr.mxu0 0.0
        %430 = vmatpush2.msra.mxu0 0.0
        %431 = vmatprep.subr.mxu0 0.0
        %432 = vmatpush2.msra.mxu0 0.0
        %433 = vmatprep.subr.mxu0 0.0
        %434 = vmatpush2.msra.mxu0 0.0
        %435 = vmatprep.subr.mxu0 0.0
        %436 = vmatpush2.msra.mxu0 0.0
        %437 = vmatprep.subr.mxu0 0.0
        %438 = vmatpush2.msra.mxu0 0.0
        %439 = vmatprep.subr.mxu0 0.0
        %440 = vmatpush2.msra.mxu0 0.0
        %441 = vmatprep.subr.mxu0 0.0
        %442 = vmatpush2.msra.mxu0 0.0
        %443 = vmatprep.subr.mxu0 0.0
        %444 = vmatpush2.msra.mxu0 0.0
        %445 = vmatprep.subr.mxu0 0.0
        %446 = vmatpush2.msra.mxu0 0.0
        %447 = vmatprep.subr.mxu0 0.0
        %448 = vmatpush2.msra.mxu0 0.0
        %449 = vmatprep.subr.mxu0 0.0
        %450 = vmatpush2.msra.mxu0 0.0
        %451 = vmatprep.subr.mxu0 0.0
        %452 = vmatpush2.msra.mxu0 0.0
        %453 = vmatprep.subr.mxu0 0.0
        %454 = vmatpush2.msra.mxu0 0.0
        %455 = vmatprep.subr.mxu0 0.0
        %456 = vmatpush2.msra.mxu0 0.0
        %457 = vmatprep.subr.mxu0 0.0
        %458 = vmatpush2.msra.mxu0 0.0
        %459 = vmatprep.mubr.f32.mxu0 0.0
        %460 = vmatmul.mubr.f32.gmra.mxu0 %v371
        %v461 = vpop.f32.mrf.mxu0
        %v462 = vadd.f32 %v393, %v461
        %v463 = vpop.f32.mrf.mxu0
        %464 = vdwg.mxu0
        %v465 = vmax.f32 %v462, 0.0
        %v466 = vld [vmem:[%s304] sm:$0xff]
        %v467 = vld [vmem:[%s304 + $0x8] sm:$0xff]
        %v468 = vld [vmem:[%s304 + $0x10] sm:$0xff]
        %v469 = vld [vmem:[%s304 + $0x18] sm:$0xff]
        %v470 = vld [vmem:[%s304 + $0x20] sm:$0xff]
        %v471 = vld [vmem:[%s304 + $0x28] sm:$0xff]
        %v472 = vld [vmem:[%s304 + $0x30] sm:$0xff]
        %v473 = vld [vmem:[%s304 + $0x38] sm:$0xff]
        %v474 = vld [vmem:[%s304 + $0x40] sm:$0xff]
        %v475 = vld [vmem:[%s304 + $0x48] sm:$0xff]
        %v476 = vld [vmem:[%s304 + $0x50] sm:$0xff]
        %v477 = vld [vmem:[%s304 + $0x58] sm:$0xff]
        %v478 = vld [vmem:[%s304 + $0x60] sm:$0xff]
        %v479 = vld [vmem:[%s304 + $0x68] sm:$0xff]
        %v480 = vld [vmem:[%s304 + $0x70] sm:$0xff]
        %v481 = vld [vmem:[%s304 + $0x78] sm:$0xff]
        %v482 = vld [vmem:[%s363] sm:$0x1]
        %v484 = vlaneseq
        %v485 = vshrl.u32 %v484, 7
        %v486 = vsub.s32 0, %v485
        %v487 = vrot.slane %v482, %v486
        %489 = vmatprep.subr.mxu0 0.0
        %490 = vmatpush1.msra.mxu0 %v481
        %491 = vmatprep.subr.mxu0 0.0
        %492 = vmatpush1.msra.mxu0 %v480
        %493 = vmatprep.subr.mxu0 0.0
        %494 = vmatpush1.msra.mxu0 %v479
        %495 = vmatprep.subr.mxu0 0.0
        %496 = vmatpush1.msra.mxu0 %v478
        %497 = vmatprep.subr.mxu0 0.0
        %498 = vmatpush1.msra.mxu0 %v477
        %499 = vmatprep.subr.mxu0 0.0
        %500 = vmatpush1.msra.mxu0 %v476
        %501 = vmatprep.subr.mxu0 0.0
        %502 = vmatpush1.msra.mxu0 %v475
        %503 = vmatprep.subr.mxu0 0.0
        %504 = vmatpush1.msra.mxu0 %v474
        %505 = vmatprep.subr.mxu0 0.0
        %506 = vmatpush1.msra.mxu0 %v473
        %507 = vmatprep.subr.mxu0 0.0
        %508 = vmatpush1.msra.mxu0 %v472
        %509 = vmatprep.subr.mxu0 0.0
        %510 = vmatpush1.msra.mxu0 %v471
        %511 = vmatprep.subr.mxu0 0.0
        %512 = vmatpush1.msra.mxu0 %v470
        %513 = vmatprep.subr.mxu0 0.0
        %514 = vmatpush1.msra.mxu0 %v469
        %515 = vmatprep.subr.mxu0 0.0
        %516 = vmatpush1.msra.mxu0 %v468
        %517 = vmatprep.subr.mxu0 0.0
        %518 = vmatpush1.msra.mxu0 %v467
        %519 = vmatprep.subr.mxu0 0.0
        %520 = vmatpush1.msra.mxu0 %v466
        %521 = vmatprep.subr.mxu0 0.0
        %522 = vmatpush2.msra.mxu0 0.0
        %523 = vmatprep.subr.mxu0 0.0
        %524 = vmatpush2.msra.mxu0 0.0
        %525 = vmatprep.subr.mxu0 0.0
        %526 = vmatpush2.msra.mxu0 0.0
        %527 = vmatprep.subr.mxu0 0.0
        %528 = vmatpush2.msra.mxu0 0.0
        %529 = vmatprep.subr.mxu0 0.0
        %530 = vmatpush2.msra.mxu0 0.0
        %531 = vmatprep.subr.mxu0 0.0
        %532 = vmatpush2.msra.mxu0 0.0
        %533 = vmatprep.subr.mxu0 0.0
        %534 = vmatpush2.msra.mxu0 0.0
        %535 = vmatprep.subr.mxu0 0.0
        %536 = vmatpush2.msra.mxu0 0.0
        %537 = vmatprep.subr.mxu0 0.0
        %538 = vmatpush2.msra.mxu0 0.0
        %539 = vmatprep.subr.mxu0 0.0
        %540 = vmatpush2.msra.mxu0 0.0
        %541 = vmatprep.subr.mxu0 0.0
        %542 = vmatpush2.msra.mxu0 0.0
        %543 = vmatprep.subr.mxu0 0.0
        %544 = vmatpush2.msra.mxu0 0.0
        %545 = vmatprep.subr.mxu0 0.0
        %546 = vmatpush2.msra.mxu0 0.0
        %547 = vmatprep.subr.mxu0 0.0
        %548 = vmatpush2.msra.mxu0 0.0
        %549 = vmatprep.subr.mxu0 0.0
        %550 = vmatpush2.msra.mxu0 0.0
        %551 = vmatprep.subr.mxu0 0.0
        %552 = vmatpush2.msra.mxu0 0.0
        %553 = vmatprep.mubr.f32.mxu0 0.0
        %554 = vmatmul.mubr.f32.gmra.mxu0 %v465
        %v555 = vpop.f32.mrf.mxu0
        %v556 = vadd.f32 %v487, %v555
        %v557 = vpop.f32.mrf.mxu0
        %558 = vdwg.mxu0
        %s559 = sld [smem:[#allocation3 + %s38]]
        %v560 = vlaneseq
        %v561 = vand.u32 %v560, 127
        %v562 = vstv %s559
        %vm563 = vcmp.lt.s32.totalorder %v561, %v562
        %vm564 = vcmp.eq.s32.totalorder %v561, 127
        %v565 = vsel %vm564, %v556, 0.0
        %v566 = vsel %vm563, %v556, -inf
        %567 = vmax.xlane.f32.xlu0 %v566
        %v568 = vpop.xlane.xlu0 %567
        %v569 = vsub.f32 %v566, %v568
        %v570 = vmul.f32 %v569, 1.442695
        %v571 = vpow.pop %v570
        %572 = vadd.xlane.f32.xlu0 %v571
        %v573 = vpop.xlane.xlu0 %572
        %v574 = vrcp.pop %v573
        %v575 = vmul.f32 %v571, %v574
        %v576 = vadd.f32 %v575, %v565
        %577 = vst [vmem:[%s370] sm:$0xff] %v576
        %p578 = scmp.lt.s32.totalorder %s38, 1
        %s579 = scalar_select %p578, %s38, 1
        %p580 = scmp.lt.s32.totalorder %s39, 0
        %s581 = scalar_select %p580, %s39, 0
        %s582 = sadd.s32 %s581, %s579
        %s583 = smul.addr %s582, 8
        %s584 = scalar_lea.vmem %s7, %s583
        // Predicated region
        $region49: #{a_call__.1} parent=39 // pred_check
          %p585 = pneg %p198
        $region50: #{a_call__.1} parent=39 // pred_check_branch
          %587 = sbr.rel (%p585) target = $region52
        $region51: #{a_call__.1} parent=39 // pred_region
          _
        $region52: #{a_call__.1} parent=39 // pred_fallthru
          _
      $region40: #{a_call__.1} parent=5 // pred_fallthru
        _
      %p588 = scmp.le.s32.totalorder 2, %s29
      // Predicated region
      $region53: #{a_call__.1} parent=5 // pred_check
        %p589 = pneg %p588
      $region54: #{a_call__.1} parent=5 // pred_check_branch
        %591 = sbr.rel (%p589) target = $region56
      $region55: #{a_call__.1} parent=5 // pred_region
        %s592 = ssub.s32 %s29, 2
        // Predicated region
        $region57: #{a_call__.1} parent=55 // pred_check
          %p593 = pneg %p204
        $region58: #{a_call__.1} parent=55 // pred_check_branch
          %595 = sbr.rel (%p593) target = $region60
        $region59: #{a_call__.1} parent=55 // pred_region
          %p596 = scmp.lt.s32.totalorder %s40, 1
          %s597 = scalar_select %p596, %s40, 1
          %p598 = scmp.lt.s32.totalorder %s41, 0
          %s599 = scalar_select %p598, %s41, 0
          %s600 = sadd.s32 %s599, %s597
          %s601 = smul.addr %s600, 8
          %s602 = scalar_lea.vmem %s7, %s601
        $region60: #{a_call__.1} parent=55 // pred_fallthru
          _
      $region56: #{a_call__.1} parent=5 // pred_fallthru
        _
    $region6: #{a_call__.1} parent=1 // loop_footer
      %s33 = sadd.s32 1, %s29
    $region7: #{a_call__.1} parent=1 // loop_footer_branch
      %28 = sbr.rel target = $region3
    $region8: #{a_call__.1} parent=1 // loop_exit
      _
    %603 = vsyncpa [#allocation6], 1
    %s604 = scalar_lea.sflag [#allocation6], 1
    %605 = vsyncpa %s604, 1
    %606 = vsyncpa [#allocation8], 1
    %s607 = scalar_lea.sflag [#allocation8], 1
    %608 = vsyncpa %s607, 1

</llo_original>
